<compile_context>
chip_gen: v5e
topology: v5e:2x2
jax: 0.10.0
libtpu: 0.0.40
codegen_flags: <defaults>
</compile_context>

<pallas_src>
import jax
import jax.numpy as jnp
from jax.experimental import pallas as pl
from jax.experimental.pallas import tpu as pltpu


def conv1d_bias_relu_kernel(x_ref, w_ref, o_ref):
    # x_ref: (Cin, BL)        f32 -- batch folded into lanes (BL % 128 == 0)
    # w_ref: (Cout, Cin*K+1)  f32 -- tap-stacked weight + bias column
    #                                (the constant -0.5 is folded into bias)
    # o_ref: (Cout, BL)       f32 -- lane-dense output slab
    cin, bl = x_ref.shape
    _, wk = w_ref.shape
    k_taps = (wk - 1) // cin

    x = x_ref[...]
    # Tap k = left-rotate x by k lanes (XLU slot, cheap).  Columns whose
    # window wraps or crosses a batch boundary only affect output positions
    # >= Lout, which the wrapper discards.
    taps = [x] + [pltpu.roll(x, shift=bl - k, axis=1) for k in range(1, k_taps)]
    ones = jnp.ones((1, bl), dtype=x.dtype)             # bias row
    stacked = jnp.concatenate(taps + [ones], axis=0)    # (Cin*K+1, BL)

    # One fused MXU dot: all conv taps + bias (with -0.5 folded) in one push.
    acc = jnp.dot(w_ref[...], stacked, preferred_element_type=jnp.float32)

    # TODO(synk): MaxPool1d(kernel_size=1) is an exact identity -> no-op here.
    o_ref[...] = jnp.maximum(acc, 0.0).astype(o_ref.dtype)


def prepare_params(w, b):
    """One-time parameter preparation (hoisted out of the forward path).

    w: (Cout, Cin, K), b: (Cout,)  ->  (Cout, Cin*K + 1) stacked weight whose
    last column is (b - 0.5); column order matches the kernel's stacked
    operand rows: [tap0 x Cin, tap1 x Cin, ..., tapK-1 x Cin, ones].
    """
    cout, cin, k = w.shape
    w_stk = jnp.transpose(w, (0, 2, 1)).reshape(cout, k * cin)   # tap-major
    bias_col = (b - 0.5).reshape(cout, 1)                        # fold -0.5
    return jnp.concatenate([w_stk, bias_col], axis=1), (cout, cin, k)


def model_forward(x, w_stk, dims):
    cout, cin, k = dims
    n, cin_x, l = x.shape
    assert cin_x == cin
    lout = l - k + 1
    # Roll-wrap invariant: contaminated columns land at positions >= Lout.
    assert k - 1 <= l - lout

    # Fold the batch into the lane dimension; pad flattened width to a
    # multiple of 128 -> unmasked full-width vector stores for any N.
    bl = n * l
    bl_pad = ((bl + 127) // 128) * 128
    x_flat = jnp.transpose(x, (1, 0, 2)).reshape(cin, bl)        # (Cin, N*L)
    if bl_pad != bl:
        x_flat = jnp.pad(x_flat, ((0, 0), (0, bl_pad - bl)))

    cost = pl.CostEstimate(
        flops=2 * n * cout * (cin * k + 1) * lout,
        transcendentals=0,
        bytes_accessed=(x_flat.size + w_stk.size + cout * bl_pad) * 4,
    )

    out_flat = pl.pallas_call(
        conv1d_bias_relu_kernel,
        out_shape=jax.ShapeDtypeStruct((cout, bl_pad), x.dtype),
        grid_spec=pltpu.PrefetchScalarGridSpec(
            num_scalar_prefetch=0,
            grid=(1,),                     # whole problem fits VMEM everywhere
            in_specs=[
                pl.BlockSpec((cin, bl_pad), lambda i: (0, 0)),
                pl.BlockSpec(w_stk.shape, lambda i: (0, 0)),
            ],
            out_specs=pl.BlockSpec((cout, bl_pad), lambda i: (0, 0)),
        ),
        compiler_params=pltpu.CompilerParams(
            dimension_semantics=("arbitrary",),
            # Fuse the x transpose/reshape/pad into the pallas_call operand
            # instead of materializing x_flat as a standalone HBM array.
            allow_input_fusion=[True, False],
        ),
        cost_estimate=cost,
    )(x_flat, w_stk)

    # (Cout, N*L) -> keep valid-conv columns -> (N, Cout, Lout) (PyTorch NCL).
    # (A channel-major consumer could take out_flat directly and skip this.)
    out = out_flat[:, :bl].reshape(cout, n, l)[:, :, :lout]
    return jnp.transpose(out, (1, 0, 2))


if __name__ == "__main__":
    key = jax.random.PRNGKey(0)
    kx, kw, kb = jax.random.split(key, 3)

    N, Cin, L = 2, 3, 64            # small shapes consistent with the module
    Cout, K = 8, 3

    x = jax.random.normal(kx, (N, Cin, L), dtype=jnp.float32)
    # PyTorch-style init: U(-bound, bound), bound = 1/sqrt(Cin*K)
    bound = 1.0 / jnp.sqrt(Cin * K)
    w = jax.random.uniform(kw, (Cout, Cin, K), minval=-bound, maxval=bound,
                           dtype=jnp.float32)
    b = jax.random.uniform(kb, (Cout,), minval=-bound, maxval=bound,
                           dtype=jnp.float32)

    # Parameter prep done once (hoisted out of the forward path).
    w_stk, dims = prepare_params(w, b)
    w_stk = jax.block_until_ready(w_stk)

    out = jax.block_until_ready(model_forward(x, w_stk, dims))

    # Pure-JAX reference check.
    ref = jax.lax.conv_general_dilated(
        x, w, window_strides=(1,), padding="VALID",
        dimension_numbers=("NCH", "OIH", "NCH"))
    ref = jnp.maximum(ref + b[None, :, None] - 0.5, 0.0)
    assert out.shape == (N, Cout, L - K + 1)
    assert jnp.allclose(out, ref, atol=1e-5, rtol=1e-5)

    print("KERNEL_OK")
</pallas_src>

<mosaic_0001>
module attributes {stable_mosaic.version = 11 : i64} {
  func.func @conv1d_bias_relu_kernel(%arg0: i32, %arg1: memref<3x128xf32, #tpu.memory_space<vmem>>, %arg2: memref<8x10xf32, #tpu.memory_space<vmem>>, %arg3: memref<8x128xf32, #tpu.memory_space<vmem>>) attributes {dimension_semantics = [#tpu.dimension_semantics<arbitrary>], iteration_bounds = array<i64: 1>, scalar_prefetch = 0 : i64, scratch_operands = 0 : i64, tpu.core_type = #tpu.core_type<tc>, window_params = [{pipeline_mode = #tpu.pipeline_mode<synchronous>, transform_indices = @transform_0, window_bounds = array<i64: 3, 128>}, {pipeline_mode = #tpu.pipeline_mode<synchronous>, transform_indices = @transform_1, window_bounds = array<i64: 8, 10>}, {pipeline_mode = #tpu.pipeline_mode<synchronous>, transform_indices = @transform_2, window_bounds = array<i64: 8, 128>}]} {
    %c0 = arith.constant 0 : index
    %c0_0 = arith.constant 0 : index
    %0 = vector.load %arg1[%c0, %c0_0] : memref<3x128xf32, #tpu.memory_space<vmem>>, vector<3x128xf32>
    %c127_i32 = arith.constant 127 : i32
    %1 = tpu.dynamic_rotate %0 by %c127_i32 dim 1 : vector<3x128xf32>, i32 -> vector<3x128xf32>
    %c126_i32 = arith.constant 126 : i32
    %2 = tpu.dynamic_rotate %0 by %c126_i32 dim 1 : vector<3x128xf32>, i32 -> vector<3x128xf32>
    %cst = arith.constant 1.000000e+00 : f32
    %3 = vector.broadcast %cst : f32 to vector<1x128xf32>
    %4 = tpu.concatenate %0, %1, %2, %3 in 0 : vector<3x128xf32>, vector<3x128xf32>, vector<3x128xf32>, vector<1x128xf32> -> vector<10x128xf32>
    %c0_1 = arith.constant 0 : index
    %c0_2 = arith.constant 0 : index
    %5 = vector.load %arg2[%c0_1, %c0_2] : memref<8x10xf32, #tpu.memory_space<vmem>>, vector<8x10xf32>
    %cst_3 = arith.constant dense<0.000000e+00> : vector<8x128xf32>
    %6 = tpu.matmul %5, %4, %cst_3 {dimension_numbers = #tpu.dot_dimension_numbers<[1], [0], [0], [1], [0, 0, 1, 1], [], []>} : vector<8x10xf32>, vector<10x128xf32>, vector<8x128xf32> -> vector<8x128xf32>
    %cst_4 = arith.constant 0.000000e+00 : f32
    %7 = vector.broadcast %cst_4 : f32 to vector<8x128xf32>
    %8 = arith.maximumf %6, %7 : vector<8x128xf32>
    %c0_5 = arith.constant 0 : index
    %c0_6 = arith.constant 0 : index
    %9 = vector.load %arg3[%c0_5, %c0_6] : memref<8x128xf32, #tpu.memory_space<vmem>>, vector<8x128xf32>
    tpu.vector_store %arg3[%c0_5, %c0_6], %8 {strides = array<i32>} : memref<8x128xf32, #tpu.memory_space<vmem>>, vector<8x128xf32>,
    return
  }
  func.func @transform_0(%arg0: i32) -> (i32, i32) {
    %c0_i32 = arith.constant 0 : i32
    %c0_i32_0 = arith.constant 0 : i32
    %c0_i32_1 = arith.constant 0 : i32
    return %c0_i32, %c0_i32_0 : i32, i32
  }
  func.func @transform_1(%arg0: i32) -> (i32, i32) {
    %c0_i32 = arith.constant 0 : i32
    %c0_i32_0 = arith.constant 0 : i32
    %c0_i32_1 = arith.constant 0 : i32
    return %c0_i32, %c0_i32_0 : i32, i32
  }
  func.func @transform_2(%arg0: i32) -> (i32, i32) {
    %c0_i32 = arith.constant 0 : i32
    %c0_i32_0 = arith.constant 0 : i32
    %c0_i32_1 = arith.constant 0 : i32
    return %c0_i32, %c0_i32_0 : i32, i32
  }
}

</mosaic_0001>

<llo_original>
// kernel: tpu_custom_call.1
$region0: #{tpu_custom_call.1}
  #allocation0 [shape = 'u32[]', space=smem, size = 0x4, offset = 0x4, fixed_abs, tag = 'smem constant byte address 0x4 - core index']
  #allocation1 [shape = 'u32[72,128]{1,0:T(1,128)}', space=vmem, size = 0x9000, scoped, tag = 'internal scratch']
  %s0 = inlined_call_operand.hbm [shape: f32[3,128], index: 0, kind: input, shape index: {}]
  %s1 = inlined_call_operand.hbm [shape: f32[8,10], index: 1, kind: input, shape index: {}]
  %s2 = inlined_call_operand.hbm [shape: f32[8,128], index: 2, kind: output, shape index: {}]
  %s3 = sld [smem:[#allocation0]]
  $region26: #{tpu_custom_call.1} parent=0
    _
  %s5 = ssub.s32 1, %s3
  %s6 = scalar_select 0, %s5, %s3
  $region1: #{tpu_custom_call.1} parent=0
    #allocation2 [shape = 'u8[2048]{0}', space=vmem, size = 0x800, scoped, tag = 'input window, operand 0, single buffered']
    #allocation3 [shape = 's32[1]{0}', space=sflag, size = 0x4, scoped, tag = 'scoped memory for tpu_custom_call.1']
    #allocation4 [shape = 's32[1]{0}', space=sflag, size = 0x4, scoped, tag = 'scoped memory for tpu_custom_call.1']
    #allocation5 [shape = 'u8[4096]{0}', space=vmem, size = 0x1000, scoped, tag = 'input window, operand 1, single buffered']
    #allocation6 [shape = 's32[1]{0}', space=sflag, size = 0x4, scoped, tag = 'scoped memory for tpu_custom_call.1']
    #allocation7 [shape = 'u8[4096]{0}', space=vmem, size = 0x1000, scoped, tag = 'output window, operand 0, single buffered']
    %7 = vsyncpa [#allocation3], 0
    %8 = vsyncpa [#allocation6], 0
    %9 = vsyncpa [#allocation4], 0
    // Predicated region
    $region2: #{tpu_custom_call.1} parent=1 // pred_check
      _
    $region3: #{tpu_custom_call.1} parent=1 // pred_check_branch
      %11 = sbr.rel (0) target = $region5
    $region4: #{tpu_custom_call.1} parent=1 // pred_region
      %13 = vsyncadd [#allocation3], 0
      %s15 = sshll.u32 %s0, 4
      %s16 = int_to_ptr.hbm [resolvable:$true] %s15
      %s17 = sshll.u32 [#allocation2], 4
      %s18 = int_to_ptr.vmem [resolvable:$true] %s17
      %20 = dma.hbm_to_vmem [thread:$0]  %s16, 64, %s18, [#allocation3]
    $region5: #{tpu_custom_call.1} parent=1 // pred_fallthru
      _
    // Predicated region
    $region6: #{tpu_custom_call.1} parent=1 // pred_check
      _
    $region7: #{tpu_custom_call.1} parent=1 // pred_check_branch
      %22 = sbr.rel (0) target = $region9
    $region8: #{tpu_custom_call.1} parent=1 // pred_region
      %24 = vsyncadd [#allocation6], 0
      %s26 = sshll.u32 %s1, 4
      %s27 = int_to_ptr.hbm [resolvable:$true] %s26
      %s28 = sshll.u32 [#allocation5], 4
      %s29 = int_to_ptr.vmem [resolvable:$true] %s28
      %31 = dma.hbm_to_vmem [thread:$0]  %s27, 128, %s29, [#allocation6]
    $region9: #{tpu_custom_call.1} parent=1 // pred_fallthru
      _
    // Predicated region
    $region10: #{tpu_custom_call.1} parent=1 // pred_check
      _
    $region11: #{tpu_custom_call.1} parent=1 // pred_check_branch
      %33 = sbr.rel (0) target = $region13
    $region12: #{tpu_custom_call.1} parent=1 // pred_region
      %35 = dma.done [#allocation3], 64
    $region13: #{tpu_custom_call.1} parent=1 // pred_fallthru
      _
    // Predicated region
    $region14: #{tpu_custom_call.1} parent=1 // pred_check
      _
    $region15: #{tpu_custom_call.1} parent=1 // pred_check_branch
      %37 = sbr.rel (0) target = $region17
    $region16: #{tpu_custom_call.1} parent=1 // pred_region
      %39 = dma.done [#allocation6], 128
    $region17: #{tpu_custom_call.1} parent=1 // pred_fallthru
      _
    %v40 = vld [vmem:[#allocation2] sm:$0x7]
    %41 = vrot.lane.b32.xlu0 %v40, 127
    %v42 = vpop.permute.xlu0 %41
    %43 = vrot.lane.b32.xlu0 %v40, 126
    %v44 = vpop.permute.xlu0 %43
    %v46 = vrot.slane %v42, 5
    %v49 = vrot.slane %v44, 2
    %vm51 = vcmask 1042432
    %v52 = vsel %vm51, %v40, %v46
    %vm53 = vcmask 1045504
    %v54 = vsel %vm53, %v52, %v49
    %vm55 = vcmask 1040384
    %v56 = vsel %vm55, %v49, 1.0
    %v57 = vld [vmem:[#allocation5] sm:$0xff]
    %vm58 = vcmask 80896
    %v60 = vsel %vm58, %v57, 0
    %vm62 = vcmask 1041408
    %v64 = vsel %vm62, %v56, 0
    %66 = vmatpush.msra.mxu0 0.0
    %67 = vmatpush.msra.mxu0 0.0
    %68 = vmatpush.msra.mxu0 0.0
    %69 = vmatpush.msra.mxu0 0.0
    %70 = vmatpush.msra.mxu0 0.0
    %71 = vmatpush.msra.mxu0 0.0
    %72 = vmatpush.msra.mxu0 0.0
    %73 = vmatpush.msra.mxu0 0.0
    %74 = vmatpush.msra.mxu0 0.0
    %75 = vmatpush.msra.mxu0 0.0
    %76 = vmatpush.msra.mxu0 0.0
    %77 = vmatpush.msra.mxu0 0.0
    %78 = vmatpush.msra.mxu0 0.0
    %79 = vmatpush.msra.mxu0 0.0
    %80 = vmatpush.msra.mxu0 %v64
    %81 = vmatpush.msra.mxu0 %v54
    %82 = vmatmul.f32.gmra.mxu0 %v60
    %v83 = vpop.f32.mrf.mxu0
    %v84 = vadd.f32 0.0, %v83
    %85 = vdwg.mxu0
    %v86 = vmax.f32 %v84, 0.0
    %87 = vst [vmem:[#allocation7] sm:$0xff] %v86
    // Predicated region
    $region18: #{tpu_custom_call.1} parent=1 // pred_check
      _
    $region19: #{tpu_custom_call.1} parent=1 // pred_check_branch
      %89 = sbr.rel (0) target = $region21
    $region20: #{tpu_custom_call.1} parent=1 // pred_region
      %91 = vsyncadd [#allocation4], 0
      %s93 = sshll.u32 [#allocation7], 4
      %s94 = int_to_ptr.vmem [resolvable:$true] %s93
      %s95 = sshll.u32 %s2, 4
      %s96 = int_to_ptr.hbm [resolvable:$true] %s95
      %98 = dma.vmem_to_hbm [thread:$0]  %s94, 128, %s96, [#allocation4]
    $region21: #{tpu_custom_call.1} parent=1 // pred_fallthru
      _
    // Predicated region
    $region22: #{tpu_custom_call.1} parent=1 // pred_check
      _
    $region23: #{tpu_custom_call.1} parent=1 // pred_check_branch
      %100 = sbr.rel (0) target = $region25
    $region24: #{tpu_custom_call.1} parent=1 // pred_region
      %102 = dma.done [#allocation4], 128
    $region25: #{tpu_custom_call.1} parent=1 // pred_fallthru
      _
    %103 = vsyncpa [#allocation3], 1
    %104 = vsyncpa [#allocation6], 1
    %105 = vsyncpa [#allocation4], 1

</llo_original>
